<compile_context>
chip_gen: v5e
topology: v5e:2x2
jax: 0.10.0
libtpu: 0.0.40
codegen_flags: <defaults>
</compile_context>

<pallas_src>
import functools

import jax
import jax.numpy as jnp
from jax.experimental import pallas as pl
from jax.experimental.pallas import tpu as pltpu


def _is_half(dt) -> bool:
    return jnp.dtype(dt) in (jnp.dtype(jnp.float16), jnp.dtype(jnp.bfloat16))


def _t5_layernorm_kernel(x_ref, w_ref, o_ref, *, eps, weight_is_half, out_is_half):
    # x_ref: (block_rows, d_model) tile of hidden states
    # w_ref: (1, d_model) weight, resident across all grid steps (constant index_map)
    #
    # fp32 accumulation of the mean-of-squares, exactly like the PyTorch module.
    x_f32 = x_ref[...].astype(jnp.float32)
    variance = jnp.mean(x_f32 * x_f32, axis=-1, keepdims=True)   # (block_rows, 1) fp32
    inv_rms = jax.lax.rsqrt(variance + eps)                      # EUP, fp32
    # NOTE: on a ragged last tile the padded rows also flow through rsqrt; the
    # math is strictly per-row and the pipeline's masked writeback discards
    # them, so real rows are never contaminated.

    # Re-read + re-cast x AFTER the reduce instead of keeping x_f32 live across
    # it: the reload is a cheap VMEM vld and drops the fp32 temp's live range
    # (matters on v7x's 64 MiB VMEM; the extra cast hides under memory stalls
    # on v5e/v6e).
    x_again = x_ref[...].astype(jnp.float32)
    w = w_ref[...]
    if weight_is_half:
        # torch semantics: cast normalized activations to weight.dtype BEFORE
        # the scale; multiply runs packed in the half dtype.
        out = w * (x_again * inv_rms).astype(w.dtype)
    elif out_is_half:
        # out_dtype override (fp32 weight, half output): do the final scale in
        # the packed half dtype -> one fewer fp32 mul/elem + dense packed
        # stores (VALU relief on v7x; neutral elsewhere).  Weight cast is once
        # per tile, not per element column.
        out = w.astype(o_ref.dtype) * (x_again * inv_rms).astype(o_ref.dtype)
    else:
        # fp32 weight, fp32 output (torch-faithful default).
        out = w * (x_again * inv_rms)
    o_ref[...] = out.astype(o_ref.dtype)


def _pick_block_rows(d_model, in_dtype, out_dtype):
    """Row tile sized against a ~5 MiB per-tile budget (in + out + fp32 temps).

    Double-buffered by the pipeline this is ~10 MiB of VMEM for the streamed
    tiles, leaving ample headroom on every generation (v7x has 64 MiB physical
    per TC).  512-row tiles already reach ~85% of HBM roofline; bigger tiles
    buy ~1% and double pressure, so we cap at 512.
    """
    in_isz = jnp.dtype(in_dtype).itemsize
    out_isz = jnp.dtype(out_dtype).itemsize
    # Sublane multiple from the *narrower* of input/output so packed half
    # outputs keep dense (unmasked) stores.
    sublane = 16 if min(in_isz, out_isz) < 4 else 8
    # Real per-row VMEM: in tile + out tile + fp32 temporaries materialized by
    # the kernel (x cast + normed product; only ~1x extra when input is fp32).
    fp32_temps = 1 if in_isz == 4 else 2
    bytes_per_row = d_model * (in_isz + out_isz + 4 * fp32_temps)
    budget = 5 * 1024 * 1024
    block_rows = (budget // max(bytes_per_row, 1)) // sublane * sublane
    block_rows = max(sublane, min(512, block_rows))
    return block_rows, sublane


def _vmem_limit_bytes():
    """Per-generation VMEM limit: headroom on v7x (64 MiB), generous on v5e/v6e."""
    try:
        cap = int(pltpu.get_tpu_info().vmem_capacity_bytes)
    except Exception:
        cap = 64 * 1024 * 1024  # conservative default (v7x-class)
    limit = (3 * cap) // 4       # 48 MiB on 64 MiB chips, 96 MiB on 128 MiB chips
    return int(max(32 * 1024 * 1024, min(limit, 96 * 1024 * 1024)))


def t5_layer_norm(hidden_states, weight, eps=1e-6, block_rows=None,
                  out_dtype=None, buffer_count=2):
    """T5-style RMS layer norm over the last axis.

    hidden_states: (..., d_model); weight: (d_model,).
    Output dtype follows torch promotion: weight.dtype if weight is half
    precision, else fp32.  When activations are bf16 but weight is fp32, pass
    out_dtype=jnp.bfloat16 to halve writeback HBM bytes (~25-30% wall-clock on
    the mem-bound v5e/v6e) at the cost of deviating from torch's fp32 output.
    buffer_count>2 opts into pl.Buffered(n) on the x input (v7x sweep knob).
    """
    orig_shape = hidden_states.shape
    d_model = orig_shape[-1]
    assert weight.shape == (d_model,)

    x2d = hidden_states.reshape(-1, d_model)
    rows = x2d.shape[0]

    weight_is_half = _is_half(weight.dtype)
    if out_dtype is None:
        out_dtype = weight.dtype if weight_is_half else jnp.float32
    out_dtype = jnp.dtype(out_dtype)
    out_is_half = _is_half(out_dtype)

    auto_rows, sublane = _pick_block_rows(d_model, x2d.dtype, out_dtype)
    if block_rows is None:
        block_rows = auto_rows
        # Keep >= ~4 grid steps on medium/large inputs so the DMA pipeline
        # overlaps load/compute/store and dimension_semantics=("parallel",)
        # can give each v7x TensorCore >= 2 tiles.  Tiny inputs fall through
        # to a single full-extent tile below.
        if rows >= 4 * sublane:
            min_steps_rows = pl.cdiv(pl.cdiv(rows, 4), sublane) * sublane
            block_rows = min(block_rows, min_steps_rows)
    else:
        # Round caller-provided tile to the sublane multiple for these dtypes.
        block_rows = max(sublane, (block_rows // sublane) * sublane)
    if block_rows >= rows:
        block_rows = rows  # single full-extent tile (full-dim exception to (8,128))

    # Ragged last tile is handled by the pipeline (masked partial stores); the
    # per-row reduction means out-of-bounds rows never contaminate real rows.
    num_tiles = pl.cdiv(rows, block_rows)

    w2d = weight.reshape(1, d_model)

    kernel = functools.partial(
        _t5_layernorm_kernel, eps=eps,
        weight_is_half=weight_is_half, out_is_half=out_is_half)

    in_bytes = rows * d_model * jnp.dtype(x2d.dtype).itemsize
    out_bytes = rows * d_model * out_dtype.itemsize
    w_bytes = d_model * jnp.dtype(weight.dtype).itemsize
    cost = pl.CostEstimate(
        flops=int(4 * rows * d_model),      # square + reduce + 2 muls
        transcendentals=int(rows),          # rsqrt per row
        bytes_accessed=int(in_bytes + out_bytes + w_bytes),
    )

    x_spec_kwargs = {}
    if buffer_count != 2:
        # v7x knob: a third buffer hides per-step DMA issue latency if the
        # smaller tiles leave the copy exposed; sweep 2 vs 3 with a bundle dump.
        x_spec_kwargs["pipeline_mode"] = pl.Buffered(buffer_count)
    x_spec = pl.BlockSpec((block_rows, d_model), lambda i: (i, 0), **x_spec_kwargs)

    out = pl.pallas_call(
        kernel,
        out_shape=jax.ShapeDtypeStruct((rows, d_model), out_dtype),
        grid_spec=pltpu.PrefetchScalarGridSpec(
            num_scalar_prefetch=0,
            grid=(num_tiles,),
            in_specs=[
                x_spec,
                # Constant index_map -> same block every step; Pallas keeps it
                # resident (fetched once).
                # TODO(synk): confirm in a bundle dump that the weight is not
                # re-DMA'd per step; if it is, stage it into VMEM scratch under
                # pl.when(pl.program_id(0) == 0).
                pl.BlockSpec((1, d_model), lambda i: (0, 0)),
            ],
            out_specs=pl.BlockSpec((block_rows, d_model), lambda i: (i, 0)),
        ),
        compiler_params=pltpu.CompilerParams(
            # Row tiles are independent -> shard across v7x's two TensorCores.
            dimension_semantics=("parallel",),
            vmem_limit_bytes=_vmem_limit_bytes(),
        ),
        cost_estimate=cost,
    )(x2d, w2d)

    return out.reshape(orig_shape[:-1] + (d_model,))


def _ref_t5_layer_norm(x, w, eps):
    var = jnp.mean(x.astype(jnp.float32) ** 2, axis=-1, keepdims=True)
    h = x.astype(jnp.float32) * jax.lax.rsqrt(var + eps)
    if _is_half(w.dtype):
        h = h.astype(w.dtype)
    return w * h


if __name__ == "__main__":
    key = jax.random.PRNGKey(0)
    eps = 1e-6
    k1, k2, k3, k4, k5 = jax.random.split(key, 5)

    # Case 1: module-faithful small shape, fp32 in / fp32 weight (ones init).
    batch, seq, d_model = 2, 8, 32
    x = jax.random.normal(k1, (batch, seq, d_model), dtype=jnp.float32)
    weight = jnp.ones((d_model,), dtype=jnp.float32)
    out = jax.block_until_ready(t5_layer_norm(x, weight, eps=eps))
    ref = _ref_t5_layer_norm(x, weight, eps)
    assert out.shape == x.shape and out.dtype == jnp.float32
    assert jnp.allclose(out, ref, atol=1e-5, rtol=1e-5)

    # Case 2: multi-tile path (explicit small row tile), fp32.
    x2 = jax.random.normal(k2, (4, 64, 256), dtype=jnp.float32)
    w2 = 1.0 + 0.1 * jax.random.normal(k3, (256,), dtype=jnp.float32)
    out2 = jax.block_until_ready(t5_layer_norm(x2, w2, eps=eps, block_rows=64))
    ref2 = _ref_t5_layer_norm(x2, w2, eps)
    assert jnp.allclose(out2, ref2, atol=1e-5, rtol=1e-5)

    # Case 3: ragged rows (last tile partial) + bf16 input with fp32 weight
    # (torch promotion -> fp32 output).
    x3 = jax.random.normal(k3, (3, 10, 128), dtype=jnp.bfloat16)
    w3 = jnp.ones((128,), dtype=jnp.float32)
    out3 = jax.block_until_ready(t5_layer_norm(x3, w3, eps=eps, block_rows=8))
    ref3 = _ref_t5_layer_norm(x3, w3, eps)
    assert out3.dtype == jnp.float32
    assert jnp.allclose(out3, ref3, atol=1e-4, rtol=1e-4)

    # Case 4: auto tiling with the min-steps cap (>=4 grid steps) + bf16
    # writeback override (fp32 weight, bf16 output, packed final multiply).
    x4 = jax.random.normal(k4, (2, 128, 256), dtype=jnp.bfloat16)
    w4 = 1.0 + 0.1 * jax.random.normal(k5, (256,), dtype=jnp.float32)
    out4 = jax.block_until_ready(
        t5_layer_norm(x4, w4, eps=eps, out_dtype=jnp.bfloat16))
    ref4 = _ref_t5_layer_norm(x4, w4, eps)
    assert out4.dtype == jnp.bfloat16
    assert jnp.allclose(out4.astype(jnp.float32), ref4, atol=3e-2, rtol=3e-2)

    # Case 5: half-precision weight path (torch: cast-before-scale, bf16 out).
    x5 = jax.random.normal(k1, (2, 16, 64), dtype=jnp.bfloat16)
    w5 = jnp.ones((64,), dtype=jnp.bfloat16)
    out5 = jax.block_until_ready(t5_layer_norm(x5, w5, eps=eps))
    ref5 = _ref_t5_layer_norm(x5, w5, eps)
    assert out5.dtype == jnp.bfloat16
    assert jnp.allclose(out5.astype(jnp.float32), ref5.astype(jnp.float32),
                        atol=3e-2, rtol=3e-2)

    print("KERNEL_OK")
</pallas_src>

<mosaic_0001>
module attributes {stable_mosaic.version = 11 : i64} {
  func.func @_t5_layernorm_kernel(%arg0: i32, %arg1: memref<16x32xf32, #tpu.memory_space<vmem>>, %arg2: memref<1x32xf32, #tpu.memory_space<vmem>>, %arg3: memref<16x32xf32, #tpu.memory_space<vmem>>) attributes {dimension_semantics = [#tpu.dimension_semantics<parallel>], iteration_bounds = array<i64: 1>, scalar_prefetch = 0 : i64, scratch_operands = 0 : i64, tpu.core_type = #tpu.core_type<tc>, window_params = [{transform_indices = @transform_0, window_bounds = array<i64: 16, 32>}, {pipeline_mode = #tpu.pipeline_mode<synchronous>, transform_indices = @transform_1, window_bounds = array<i64: 1, 32>}, {transform_indices = @transform_2, window_bounds = array<i64: 16, 32>}]} {
    %c0 = arith.constant 0 : index
    %c0_0 = arith.constant 0 : index
    %0 = vector.load %arg1[%c0, %c0_0] : memref<16x32xf32, #tpu.memory_space<vmem>>, vector<16x32xf32>
    %1 = arith.mulf %0, %0 : vector<16x32xf32>
    %cst = arith.constant dense<0.000000e+00> : vector<16xf32>
    %2 = vector.multi_reduction <add>, %1, %cst [1] : vector<16x32xf32> to vector<16xf32>
    %3 = vector.shape_cast %2 : vector<16xf32> to vector<16x1xf32>
    %cst_1 = arith.constant 3.200000e+01 : f32
    %4 = vector.broadcast %cst_1 : f32 to vector<16x1xf32>
    %5 = arith.divf %3, %4 : vector<16x1xf32>
    %cst_2 = arith.constant 9.99999997E-7 : f32
    %6 = vector.broadcast %cst_2 : f32 to vector<16x1xf32>
    %7 = arith.addf %5, %6 : vector<16x1xf32>
    %8 = math.rsqrt %7 : vector<16x1xf32>
    %c0_3 = arith.constant 0 : index
    %c0_4 = arith.constant 0 : index
    %9 = vector.load %arg1[%c0_3, %c0_4] : memref<16x32xf32, #tpu.memory_space<vmem>>, vector<16x32xf32>
    %c0_5 = arith.constant 0 : index
    %c0_6 = arith.constant 0 : index
    %10 = vector.load %arg2[%c0_5, %c0_6] : memref<1x32xf32, #tpu.memory_space<vmem>>, vector<1x32xf32>
    %11 = vector.broadcast %8 : vector<16x1xf32> to vector<16x32xf32>
    %12 = arith.mulf %9, %11 : vector<16x32xf32>
    %13 = vector.broadcast %10 : vector<1x32xf32> to vector<16x32xf32>
    %14 = arith.mulf %13, %12 : vector<16x32xf32>
    %c0_7 = arith.constant 0 : index
    %c0_8 = arith.constant 0 : index
    %15 = vector.load %arg3[%c0_7, %c0_8] : memref<16x32xf32, #tpu.memory_space<vmem>>, vector<16x32xf32>
    tpu.vector_store %arg3[%c0_7, %c0_8], %14 {strides = array<i32>} : memref<16x32xf32, #tpu.memory_space<vmem>>, vector<16x32xf32>,
    return
  }
  func.func @transform_0(%arg0: i32) -> (i32, i32) {
    %c0_i32 = arith.constant 0 : i32
    %c0_i32_0 = arith.constant 0 : i32
    return %arg0, %c0_i32 : i32, i32
  }
  func.func @transform_1(%arg0: i32) -> (i32, i32) {
    %c0_i32 = arith.constant 0 : i32
    %c0_i32_0 = arith.constant 0 : i32
    %c0_i32_1 = arith.constant 0 : i32
    return %c0_i32, %c0_i32_0 : i32, i32
  }
  func.func @transform_2(%arg0: i32) -> (i32, i32) {
    %c0_i32 = arith.constant 0 : i32
    %c0_i32_0 = arith.constant 0 : i32
    return %arg0, %c0_i32 : i32, i32
  }
}

</mosaic_0001>

<llo_original>
// kernel: tpu_custom_call.1
$region0: #{tpu_custom_call.1}
  #allocation0 [shape = 'u32[]', space=smem, size = 0x4, offset = 0x4, fixed_abs, tag = 'smem constant byte address 0x4 - core index']
  #allocation1 [shape = 'u32[72,128]{1,0:T(1,128)}', space=vmem, size = 0x9000, scoped, tag = 'internal scratch']
  %s0 = inlined_call_operand.hbm [shape: f32[16,32], index: 0, kind: input, shape index: {}]
  %s1 = inlined_call_operand.hbm [shape: f32[1,32], index: 1, kind: input, shape index: {}]
  %s2 = inlined_call_operand.hbm [shape: f32[16,32], index: 2, kind: output, shape index: {}]
  %s3 = sld [smem:[#allocation0]]
  $region26: #{tpu_custom_call.1} parent=0
    _
  %s5 = ssub.s32 1, %s3
  %s6 = scalar_select 0, %s5, %s3
  $region1: #{tpu_custom_call.1} parent=0
    #allocation2 [shape = 'u8[8192]{0}', space=vmem, size = 0x2000, scoped, tag = 'input window, operand 0, single buffered']
    #allocation3 [shape = 's32[1]{0}', space=sflag, size = 0x4, scoped, tag = 'scoped memory for tpu_custom_call.1']
    #allocation4 [shape = 's32[1]{0}', space=sflag, size = 0x4, scoped, tag = 'scoped memory for tpu_custom_call.1']
    #allocation5 [shape = 'u8[512]{0}', space=vmem, size = 0x400, scoped, tag = 'input window, operand 1, single buffered']
    #allocation6 [shape = 's32[1]{0}', space=sflag, size = 0x4, scoped, tag = 'scoped memory for tpu_custom_call.1']
    #allocation7 [shape = 'u8[8192]{0}', space=vmem, size = 0x2000, scoped, tag = 'output window, operand 0, single buffered']
    %7 = vsyncpa [#allocation3], 0
    %8 = vsyncpa [#allocation6], 0
    %9 = vsyncpa [#allocation4], 0
    // Predicated region
    $region2: #{tpu_custom_call.1} parent=1 // pred_check
      _
    $region3: #{tpu_custom_call.1} parent=1 // pred_check_branch
      %11 = sbr.rel (0) target = $region5
    $region4: #{tpu_custom_call.1} parent=1 // pred_region
      %13 = vsyncadd [#allocation3], 0
      %s14 = sshll.u32 %s0, 4
      %s15 = int_to_ptr.hbm [resolvable:$true] %s14
      %s16 = sshll.u32 [#allocation2], 4
      %s17 = int_to_ptr.vmem [resolvable:$true] %s16
      %22 = dma.hbm_to_vmem [thread:$0]  %s15, 256, %s17, [#allocation3], 128, 128, 8
    $region5: #{tpu_custom_call.1} parent=1 // pred_fallthru
      _
    // Predicated region
    $region6: #{tpu_custom_call.1} parent=1 // pred_check
      _
    $region7: #{tpu_custom_call.1} parent=1 // pred_check_branch
      %24 = sbr.rel (0) target = $region9
    $region8: #{tpu_custom_call.1} parent=1 // pred_region
      %26 = vsyncadd [#allocation6], 0
      %s28 = sshll.u32 %s1, 4
      %s29 = int_to_ptr.hbm [resolvable:$true] %s28
      %s30 = sshll.u32 [#allocation5], 4
      %s31 = int_to_ptr.vmem [resolvable:$true] %s30
      %33 = dma.hbm_to_vmem [thread:$0]  %s29, 16, %s31, [#allocation6]
    $region9: #{tpu_custom_call.1} parent=1 // pred_fallthru
      _
    // Predicated region
    $region10: #{tpu_custom_call.1} parent=1 // pred_check
      _
    $region11: #{tpu_custom_call.1} parent=1 // pred_check_branch
      %35 = sbr.rel (0) target = $region13
    $region12: #{tpu_custom_call.1} parent=1 // pred_region
      %37 = dma.done [#allocation3], 256
    $region13: #{tpu_custom_call.1} parent=1 // pred_fallthru
      _
    // Predicated region
    $region14: #{tpu_custom_call.1} parent=1 // pred_check
      _
    $region15: #{tpu_custom_call.1} parent=1 // pred_check_branch
      %39 = sbr.rel (0) target = $region17
    $region16: #{tpu_custom_call.1} parent=1 // pred_region
      %41 = dma.done [#allocation6], 16
    $region17: #{tpu_custom_call.1} parent=1 // pred_fallthru
      _
    %v42 = vld [vmem:[#allocation2] sm:$0xff]
    %v43 = vld [vmem:[#allocation2 + $0x8] sm:$0xff]
    %v44 = vmul.f32 %v42, %v42
    %v45 = vmul.f32 %v43, %v43
    %vm46 = vcmask 261120
    %v47 = vsel %vm46, %v44, 0.0
    %48 = vadd.xlane.f32.xlu0 %v47
    %v49 = vpop.xlane.xlu0 %48
    %v50 = vsel %vm46, %v45, 0.0
    %51 = vadd.xlane.f32.xlu0 %v50
    %v52 = vpop.xlane.xlu0 %51
    %v53 = vrcp.pop 32.0
    %v54 = vmul.f32 32.0, %v53
    %v55 = vsub.f32 1.0, %v54
    %v56 = vmul.f32 %v53, %v55
    %v57 = vadd.f32 %v53, %v56
    %vm58 = vweird.f32 %v53
    %v59 = vsel %vm58, %v53, %v57
    %v60 = vmul.f32 %v49, %v59
    %v61 = vmul.f32 %v52, %v59
    %v62 = vadd.f32 %v60, 1e-06
    %v63 = vadd.f32 %v61, 1e-06
    %v64 = vrsqrt.pop %v62
    %v65 = vmul.f32 %v64, %v62
    %v66 = vmul.f32 %v65, %v64
    %v67 = vmul.f32 0.5, %v66
    %v68 = vsub.f32 1.5, %v67
    %v69 = vmul.f32 %v64, %v68
    %vm70 = vweird.f32 %v62
    %vm71 = vweird.f32 %v64
    %vm72 = vmor %vm70, %vm71
    %v73 = vsel %vm72, %v64, %v69
    %v74 = vrsqrt.pop %v63
    %v75 = vmul.f32 %v74, %v63
    %v76 = vmul.f32 %v75, %v74
    %v77 = vmul.f32 0.5, %v76
    %v78 = vsub.f32 1.5, %v77
    %v79 = vmul.f32 %v74, %v78
    %vm80 = vweird.f32 %v63
    %vm81 = vweird.f32 %v74
    %vm82 = vmor %vm80, %vm81
    %v83 = vsel %vm82, %v74, %v79
    %v84 = vld [vmem:[#allocation5] sm:$0x1]
    %v85 = vmul.f32 %v42, %v73
    %v86 = vmul.f32 %v43, %v83
    %v88 = vperm.slane %v84, 0
    %v90 = vmul.f32 %v88, %v85
    %v91 = vmul.f32 %v88, %v86
    %92 = vst.msk [vmem:[#allocation7] sm:$0xff] %vm46, %v90
    %93 = vst.msk [vmem:[#allocation7 + $0x8] sm:$0xff] %vm46, %v91
    // Predicated region
    $region18: #{tpu_custom_call.1} parent=1 // pred_check
      _
    $region19: #{tpu_custom_call.1} parent=1 // pred_check_branch
      %95 = sbr.rel (0) target = $region21
    $region20: #{tpu_custom_call.1} parent=1 // pred_region
      %97 = vsyncadd [#allocation4], 0
      %s98 = sshll.u32 [#allocation7], 4
      %s99 = int_to_ptr.vmem [resolvable:$true] %s98
      %s100 = sshll.u32 %s2, 4
      %s101 = int_to_ptr.hbm [resolvable:$true] %s100
      %106 = dma.vmem_to_hbm [thread:$0]  %s99, 256, %s101, [#allocation4], 128, 128, 8
    $region21: #{tpu_custom_call.1} parent=1 // pred_fallthru
      _
    // Predicated region
    $region22: #{tpu_custom_call.1} parent=1 // pred_check
      _
    $region23: #{tpu_custom_call.1} parent=1 // pred_check_branch
      %108 = sbr.rel (0) target = $region25
    $region24: #{tpu_custom_call.1} parent=1 // pred_region
      %110 = dma.done [#allocation4], 256
    $region25: #{tpu_custom_call.1} parent=1 // pred_fallthru
      _
    %111 = vsyncpa [#allocation3], 1
    %112 = vsyncpa [#allocation6], 1
    %113 = vsyncpa [#allocation4], 1

</llo_original>
